<compile_context>
chip_gen: v7x
topology: tpu7x:2x2x1
jax: 0.10.0
libtpu: 0.0.40
codegen_flags: <defaults>
</compile_context>

<pallas_src>
import functools

import jax
import jax.numpy as jnp
from jax.experimental import pallas as pl
from jax.experimental.pallas import tpu as pltpu


def _round_up(x: int, m: int) -> int:
    return ((x + m - 1) // m) * m


# ----------------------------------------------------------------------------
# Kernels
# ----------------------------------------------------------------------------
def _ff_kernel_single(x_ref, w1_ref, b1_ref, w2_ref, b2_ref, o_ref):
    # Full hidden dim resident (n_h == 1): no accumulator needed.
    x = x_ref[...]
    h = jnp.dot(x, w1_ref[...], preferred_element_type=jnp.float32) + b1_ref[...]
    h = h * jax.nn.sigmoid(h)                       # SiLU (VPU/EUP, hidden under MXU)
    out = jnp.dot(h.astype(x.dtype), w2_ref[...],
                  preferred_element_type=jnp.float32) + b2_ref[...]
    o_ref[...] = out.astype(o_ref.dtype)


def _ff_kernel_acc(x_ref, w1_ref, b1_ref, w2_ref, b2_ref, o_ref, acc_ref):
    # Hidden dim chunked: reduction over grid axis 1 with an f32 accumulator.
    j = pl.program_id(1)

    @pl.when(j == 0)
    def _():
        acc_ref[...] = jnp.zeros_like(acc_ref)

    x = x_ref[...]
    h = jnp.dot(x, w1_ref[...], preferred_element_type=jnp.float32) + b1_ref[...]
    h = h * jax.nn.sigmoid(h)
    acc_ref[...] += jnp.dot(h.astype(x.dtype), w2_ref[...],
                            preferred_element_type=jnp.float32)

    @pl.when(j == pl.num_programs(1) - 1)
    def _():
        o_ref[...] = (acc_ref[...] + b2_ref[...]).astype(o_ref.dtype)


# ----------------------------------------------------------------------------
# One-time parameter preparation (outside jit)
# ----------------------------------------------------------------------------
def prepare_params(w1, b1, w2, b2, *, lane=128, hidden_align=512):
    """Transpose PyTorch nn.Linear (out,in) weights to (in,out) and zero-pad.

    D is padded to a lane multiple (128).  H is padded to a 512 multiple when
    H > 512 (so any hidden chunk size is a 512-multiple divisor), else to 128.
    Zero padding is exact: padded hidden columns get b1=0 -> SiLU(0)=0 and the
    matching zero rows of W2 contribute nothing; padded output columns are
    sliced off by the wrapper.
    """
    H, D = w1.shape
    D_p = _round_up(D, lane)
    H_p = _round_up(H, hidden_align) if H > hidden_align else _round_up(H, lane)
    w1_t = jnp.zeros((D_p, H_p), w1.dtype).at[:D, :H].set(w1.T)
    b1_r = jnp.zeros((1, H_p), b1.dtype).at[0, :H].set(b1)
    w2_t = jnp.zeros((H_p, D_p), w2.dtype).at[:H, :D].set(w2.T)
    b2_r = jnp.zeros((1, D_p), b2.dtype).at[0, :D].set(b2)
    return w1_t, b1_r, w2_t, b2_r


# ----------------------------------------------------------------------------
# Tile selection helpers (all static Python ints under jit)
# ----------------------------------------------------------------------------
def _vmem_budget_bytes() -> int:
    """Generation-aware scoped-VMEM budget (~75% of physical capacity)."""
    cap = 64 << 20  # conservative fallback (v7x-sized)
    try:
        info = pltpu.get_tpu_info()
        cap = int(info.vmem_capacity_bytes)
    except Exception:
        pass
    return int(cap * 0.75)


def _working_set_bytes(tm, th, n_h, D_p, x_item, w_item):
    bufs = 2  # Pallas double-buffers pipelined blocks
    w_bytes = bufs * (D_p * th + th * D_p) * w_item       # W1 chunk + W2 chunk
    io_bytes = bufs * 2 * tm * D_p * x_item               # x tile + out tile
    acc_bytes = tm * D_p * 4 if n_h > 1 else 0            # f32 accumulator
    h_bytes = tm * th * (4 + x_item)                      # f32 `h` + cast copy
    bias_bytes = bufs * (th + D_p) * w_item
    return w_bytes + io_bytes + acc_bytes + h_bytes + bias_bytes


def _tm_candidates(tm_cap: int):
    out, t = [], tm_cap
    while True:
        out.append(t)
        if t <= 8:
            break
        t = max(8, (t // 2 // 8) * 8)
    return out


def _select_tiles(M, D_p, H_p, x_item, w_item, budget, tm_max, th_target):
    M8 = _round_up(max(M, 1), 8)
    tm_cap = min(_round_up(tm_max, 8), M8)
    # Guarantee >= 2 row tiles when M allows it (v7x dual TensorCore).
    if M8 >= 16:
        tm_cap = min(tm_cap, max(8, _round_up((M8 + 1) // 2, 8)))

    # 1) Keep the full padded hidden dim resident (weights DMA'd once).
    for tm_try in _tm_candidates(tm_cap):
        if _working_set_bytes(tm_try, H_p, 1, D_p, x_item, w_item) <= budget:
            return tm_try, H_p

    # 2) Chunk the hidden dim: largest multiple-of-512 divisor of H_p <= target.
    if H_p % 512 == 0:
        th_try = min(_round_up(min(th_target, H_p), 512), H_p)
        while H_p % th_try:
            th_try -= 512
    else:
        th_try = H_p
    for tm_try in _tm_candidates(tm_cap):
        if _working_set_bytes(tm_try, th_try, 2, D_p, x_item, w_item) <= budget:
            return tm_try, th_try
    return 8, th_try  # last resort


# ----------------------------------------------------------------------------
# Wrapper
# ----------------------------------------------------------------------------
@functools.partial(jax.jit, static_argnames=("tm", "th"))
def feed_forward(x, w1_t, b1_r, w2_t, b2_r, *, tm=512, th=512):
    """x: (..., D).  w1_t/b1_r/w2_t/b2_r from prepare_params (padded, (in,out))."""
    orig_shape = x.shape
    D = orig_shape[-1]
    D_p, H_p = w1_t.shape
    out_dtype = x.dtype

    x2 = x.reshape(-1, D)
    M = x2.shape[0]

    x_item = jnp.dtype(x.dtype).itemsize
    w_item = jnp.dtype(w1_t.dtype).itemsize
    budget = _vmem_budget_bytes()

    tm_eff, th_eff = _select_tiles(M, D_p, H_p, x_item, w_item, budget, tm, th)
    M_p = _round_up(M, tm_eff)

    # Pad rows / feature dim only when actually needed (padding costs an extra
    # HBM read+write of the activations).
    if M_p != M or D_p != D:
        x2 = jnp.zeros((M_p, D_p), x2.dtype).at[:M, :D].set(x2)

    n_m = M_p // tm_eff
    n_h = H_p // th_eff

    ws = _working_set_bytes(tm_eff, th_eff, n_h, D_p, x_item, w_item)
    vmem_limit = min(budget, max(32 << 20, int(1.5 * ws) + (8 << 20)))

    # Advisory cost estimate so XLA schedules/overlaps the fused op sensibly.
    w_streams = 1 if n_h == 1 else n_m
    cost = pl.CostEstimate(
        flops=int(4 * M_p * D_p * H_p),
        transcendentals=int(M_p * H_p),
        bytes_accessed=int(2 * M_p * D_p * x_item
                           + w_streams * 2 * D_p * H_p * w_item
                           + (H_p + D_p) * w_item),
    )

    if n_h == 1:
        # Weights fully resident: constant block index -> single HBM fetch.
        out = pl.pallas_call(
            _ff_kernel_single,
            out_shape=jax.ShapeDtypeStruct((M_p, D_p), out_dtype),
            grid_spec=pltpu.PrefetchScalarGridSpec(
                num_scalar_prefetch=0,
                grid=(n_m,),
                in_specs=[
                    pl.BlockSpec((tm_eff, D_p), lambda i: (i, 0)),   # x row tile
                    pl.BlockSpec((D_p, H_p), lambda i: (0, 0)),      # W1^T (resident)
                    pl.BlockSpec((1, H_p), lambda i: (0, 0)),        # b1
                    pl.BlockSpec((H_p, D_p), lambda i: (0, 0)),      # W2^T (resident)
                    pl.BlockSpec((1, D_p), lambda i: (0, 0)),        # b2
                ],
                out_specs=pl.BlockSpec((tm_eff, D_p), lambda i: (i, 0)),
            ),
            compiler_params=pltpu.CompilerParams(
                dimension_semantics=("parallel",),
                vmem_limit_bytes=vmem_limit,
            ),
            cost_estimate=cost,
        )(x2, w1_t, b1_r, w2_t, b2_r)
    else:
        # Hidden dim chunked: reduction axis last, weight chunks stay
        # double-buffered (their block index changes with j).
        out = pl.pallas_call(
            _ff_kernel_acc,
            out_shape=jax.ShapeDtypeStruct((M_p, D_p), out_dtype),
            grid_spec=pltpu.PrefetchScalarGridSpec(
                num_scalar_prefetch=0,
                grid=(n_m, n_h),
                in_specs=[
                    pl.BlockSpec((tm_eff, D_p), lambda i, j: (i, 0)),   # x row tile
                    pl.BlockSpec((D_p, th_eff), lambda i, j: (0, j)),   # W1^T chunk
                    pl.BlockSpec((1, th_eff), lambda i, j: (0, j)),     # b1 chunk
                    pl.BlockSpec((th_eff, D_p), lambda i, j: (j, 0)),   # W2^T chunk
                    pl.BlockSpec((1, D_p), lambda i, j: (0, 0)),        # b2
                ],
                out_specs=pl.BlockSpec((tm_eff, D_p), lambda i, j: (i, 0)),
                scratch_shapes=[pltpu.VMEM((tm_eff, D_p), jnp.float32)],
            ),
            compiler_params=pltpu.CompilerParams(
                dimension_semantics=("parallel", "arbitrary"),
                vmem_limit_bytes=vmem_limit,
            ),
            cost_estimate=cost,
        )(x2, w1_t, b1_r, w2_t, b2_r)

    if M_p != M or D_p != D:
        out = out[:M, :D]
    return out.reshape(orig_shape)


# ----------------------------------------------------------------------------
# Reference + demo
# ----------------------------------------------------------------------------
def _ref(x, w1, b1, w2, b2):
    h = jnp.dot(x, w1.T) + b1
    h = h * jax.nn.sigmoid(h)
    return jnp.dot(h, w2.T) + b2


if __name__ == "__main__":
    # Module defaults: input_dim=512, expansion_factor=4 (hidden dim is literally 4).
    batch, seq, input_dim, expansion_factor = 2, 8, 512, 4

    key = jax.random.PRNGKey(0)
    kx, k1, k2, k3, k4 = jax.random.split(key, 5)

    x = jax.random.normal(kx, (batch, seq, input_dim), dtype=jnp.float32)

    # PyTorch nn.Linear weight layout: (out_features, in_features).
    w1 = jax.random.normal(k1, (expansion_factor, input_dim), jnp.float32) * 0.1
    b1 = jax.random.normal(k2, (expansion_factor,), jnp.float32) * 0.1
    w2 = jax.random.normal(k3, (input_dim, expansion_factor), jnp.float32) * 0.1
    b2 = jax.random.normal(k4, (input_dim,), jnp.float32) * 0.1

    # One-time weight prep (outside jit): transpose + lane/hidden padding.
    params = prepare_params(w1, b1, w2, b2)

    out = feed_forward(x, *params)
    jax.block_until_ready(out)

    ref = _ref(x, w1, b1, w2, b2)
    assert out.shape == x.shape
    assert jnp.allclose(out, ref, atol=1e-5, rtol=1e-5), "mismatch vs reference"

    print("KERNEL_OK")
</pallas_src>

<mosaic_0001>
module attributes {stable_mosaic.version = 11 : i64} {
  func.func @_ff_kernel_single(%arg0: i32, %arg1: memref<8x512xf32, #tpu.memory_space<vmem>>, %arg2: memref<512x128xf32, #tpu.memory_space<vmem>>, %arg3: memref<1x128xf32, #tpu.memory_space<vmem>>, %arg4: memref<128x512xf32, #tpu.memory_space<vmem>>, %arg5: memref<1x512xf32, #tpu.memory_space<vmem>>, %arg6: memref<8x512xf32, #tpu.memory_space<vmem>>) attributes {dimension_semantics = [#tpu.dimension_semantics<parallel>], iteration_bounds = array<i64: 2>, scalar_prefetch = 0 : i64, scratch_operands = 0 : i64, tpu.core_type = #tpu.core_type<tc>, window_params = [{transform_indices = @transform_0, window_bounds = array<i64: 8, 512>}, {pipeline_mode = #tpu.pipeline_mode<synchronous>, transform_indices = @transform_1, window_bounds = array<i64: 512, 128>}, {pipeline_mode = #tpu.pipeline_mode<synchronous>, transform_indices = @transform_2, window_bounds = array<i64: 1, 128>}, {pipeline_mode = #tpu.pipeline_mode<synchronous>, transform_indices = @transform_3, window_bounds = array<i64: 128, 512>}, {pipeline_mode = #tpu.pipeline_mode<synchronous>, transform_indices = @transform_4, window_bounds = array<i64: 1, 512>}, {transform_indices = @transform_5, window_bounds = array<i64: 8, 512>}]} {
    %c0 = arith.constant 0 : index
    %c0_0 = arith.constant 0 : index
    %0 = vector.load %arg1[%c0, %c0_0] : memref<8x512xf32, #tpu.memory_space<vmem>>, vector<8x512xf32>
    %c0_1 = arith.constant 0 : index
    %c0_2 = arith.constant 0 : index
    %1 = vector.load %arg2[%c0_1, %c0_2] : memref<512x128xf32, #tpu.memory_space<vmem>>, vector<512x128xf32>
    %cst = arith.constant dense<0.000000e+00> : vector<8x128xf32>
    %2 = tpu.matmul %0, %1, %cst {dimension_numbers = #tpu.dot_dimension_numbers<[1], [0], [0], [1], [0, 0, 1, 1], [], []>} : vector<8x512xf32>, vector<512x128xf32>, vector<8x128xf32> -> vector<8x128xf32>
    %c0_3 = arith.constant 0 : index
    %c0_4 = arith.constant 0 : index
    %3 = vector.load %arg3[%c0_3, %c0_4] : memref<1x128xf32, #tpu.memory_space<vmem>>, vector<1x128xf32>
    %4 = vector.broadcast %3 : vector<1x128xf32> to vector<8x128xf32>
    %5 = arith.addf %2, %4 : vector<8x128xf32>
    %6 = arith.negf %5 : vector<8x128xf32>
    %7 = math.exp %6 : vector<8x128xf32>
    %cst_5 = arith.constant 1.000000e+00 : f32
    %8 = vector.broadcast %cst_5 : f32 to vector<8x128xf32>
    %9 = arith.addf %8, %7 : vector<8x128xf32>
    %10 = arith.divf %8, %9 : vector<8x128xf32>
    %11 = arith.mulf %5, %10 : vector<8x128xf32>
    %c0_6 = arith.constant 0 : index
    %c0_7 = arith.constant 0 : index
    %12 = vector.load %arg4[%c0_6, %c0_7] : memref<128x512xf32, #tpu.memory_space<vmem>>, vector<128x512xf32>
    %cst_8 = arith.constant dense<0.000000e+00> : vector<8x512xf32>
    %13 = tpu.matmul %11, %12, %cst_8 {dimension_numbers = #tpu.dot_dimension_numbers<[1], [0], [0], [1], [0, 0, 1, 1], [], []>} : vector<8x128xf32>, vector<128x512xf32>, vector<8x512xf32> -> vector<8x512xf32>
    %c0_9 = arith.constant 0 : index
    %c0_10 = arith.constant 0 : index
    %14 = vector.load %arg5[%c0_9, %c0_10] : memref<1x512xf32, #tpu.memory_space<vmem>>, vector<1x512xf32>
    %15 = vector.broadcast %14 : vector<1x512xf32> to vector<8x512xf32>
    %16 = arith.addf %13, %15 : vector<8x512xf32>
    %c0_11 = arith.constant 0 : index
    %c0_12 = arith.constant 0 : index
    %17 = vector.load %arg6[%c0_11, %c0_12] : memref<8x512xf32, #tpu.memory_space<vmem>>, vector<8x512xf32>
    tpu.vector_store %arg6[%c0_11, %c0_12], %16 {strides = array<i32>} : memref<8x512xf32, #tpu.memory_space<vmem>>, vector<8x512xf32>,
    return
  }
  func.func @transform_0(%arg0: i32) -> (i32, i32) {
    %c0_i32 = arith.constant 0 : i32
    %c0_i32_0 = arith.constant 0 : i32
    return %arg0, %c0_i32 : i32, i32
  }
  func.func @transform_1(%arg0: i32) -> (i32, i32) {
    %c0_i32 = arith.constant 0 : i32
    %c0_i32_0 = arith.constant 0 : i32
    %c0_i32_1 = arith.constant 0 : i32
    return %c0_i32, %c0_i32_0 : i32, i32
  }
  func.func @transform_2(%arg0: i32) -> (i32, i32) {
    %c0_i32 = arith.constant 0 : i32
    %c0_i32_0 = arith.constant 0 : i32
    %c0_i32_1 = arith.constant 0 : i32
    return %c0_i32, %c0_i32_0 : i32, i32
  }
  func.func @transform_3(%arg0: i32) -> (i32, i32) {
    %c0_i32 = arith.constant 0 : i32
    %c0_i32_0 = arith.constant 0 : i32
    %c0_i32_1 = arith.constant 0 : i32
    return %c0_i32, %c0_i32_0 : i32, i32
  }
  func.func @transform_4(%arg0: i32) -> (i32, i32) {
    %c0_i32 = arith.constant 0 : i32
    %c0_i32_0 = arith.constant 0 : i32
    %c0_i32_1 = arith.constant 0 : i32
    return %c0_i32, %c0_i32_0 : i32, i32
  }
  func.func @transform_5(%arg0: i32) -> (i32, i32) {
    %c0_i32 = arith.constant 0 : i32
    %c0_i32_0 = arith.constant 0 : i32
    return %arg0, %c0_i32 : i32, i32
  }
}

</mosaic_0001>

<llo_original>
// kernel: feed_forward.1
$region0: #{feed_forward.1}
  #allocation0 [shape = 'u32[]', space=smem, size = 0x4, offset = 0x4, fixed_abs, tag = 'smem constant byte address 0x4 - core index']
  #allocation1 [shape = 'u32[144,128]{1,0:T(1,128)}', space=vmem, size = 0x12000, scoped, tag = 'internal scratch']
  %s0 = inlined_call_operand.hbm [shape: f32[16,512], index: 0, kind: input, shape index: {}]
  %s1 = inlined_call_operand.hbm [shape: f32[512,128], index: 1, kind: input, shape index: {}]
  %s2 = inlined_call_operand.vmem [shape: f32[1,128], index: 2, kind: input, shape index: {}]
  %s3 = inlined_call_operand.hbm [shape: f32[128,512], index: 3, kind: input, shape index: {}]
  %s4 = inlined_call_operand.vmem [shape: f32[1,512], index: 4, kind: input, shape index: {}]
  %s5 = inlined_call_operand.hbm [shape: f32[16,512], index: 5, kind: output, shape index: {}]
  %s6 = sld [smem:[#allocation0]]
  $region65: #{feed_forward.1} parent=0
    _
  %s8 = ssub.s32 1, %s6
  %s9 = scalar_select 0, %s8, %s6
  $region1: #{feed_forward.1} parent=0
    #allocation2 [shape = 'u8[32768]{0}', space=vmem, size = 0x8000, scoped, tag = 'input window, operand 0']
    #allocation3 [shape = 's32[2]{0}', space=sflag, size = 0x8, scoped, tag = 'scoped memory for feed_forward.1']
    #allocation4 [shape = 's32[2]{0}', space=sflag, size = 0x8, scoped, tag = 'scoped memory for feed_forward.1']
    #allocation5 [shape = 'u8[262144]{0}', space=vmem, size = 0x40000, scoped, tag = 'input window, operand 1, single buffered']
    #allocation6 [shape = 's32[1]{0}', space=sflag, size = 0x4, scoped, tag = 'scoped memory for feed_forward.1']
    #allocation7 [shape = 'u8[262144]{0}', space=vmem, size = 0x40000, scoped, tag = 'input window, operand 3, single buffered']
    #allocation8 [shape = 'u8[32768]{0}', space=vmem, size = 0x8000, scoped, tag = 'output window, operand 0']
    %10 = vsyncpa [#allocation3], 0
    %s11 = scalar_lea.sflag [#allocation3], 1
    %12 = vsyncpa %s11, 0
    %13 = vsyncpa [#allocation6], 0
    %14 = vsyncpa [#allocation4], 0
    %s15 = scalar_lea.sflag [#allocation4], 1
    %16 = vsyncpa %s15, 0
    loop: start=0, step=1, limit=4
    $region2: #{feed_forward.1} parent=1 // loop_pre_header
      _
    $region3: #{feed_forward.1} parent=1 // loop_header
      %s18 = sphi 0, %s22
      %p19 = scmp.ge.s32.totalorder %s18, 4
      %s28 = sphi 0, %s30
      %s31 = sphi 0, %s28
      %s32 = sphi 0, %s31
      %s48 = sphi 0, %s32
      %s52 = sphi 0, %s52
      %s54 = sphi 0, %s52
      %s55 = sphi 0, %s54
      %s69 = sphi 0, %s55
      %s73 = sphi 0, %s73
      %s75 = sphi 0, %s73
      %s76 = sphi 0, %s75
      %s90 = sphi 0, %s76
      %s94 = sphi 0, %s94
      %s96 = sphi 0, %s94
      %s97 = sphi 0, %s96
      %s111 = sphi 0, %s97
      %s115 = sphi 0, %s115
      %s117 = sphi 0, %s115
      %s118 = sphi 0, %s117
      %s132 = sphi 0, %s118
      %s138 = sphi 0, %s140
      %s141 = sphi 0, %s138
      %s142 = sphi 0, %s141
      %s158 = sphi 0, %s142
    $region4: #{feed_forward.1} parent=1 // loop_header_branch
      %21 = sbr.rel (%p19) target = $region8
    $region5: #{feed_forward.1} parent=1 // loop_body
      %s23 = ssub.s32 %s18, 1
      %s24 = ssub.s32 %s18, 2
      %s25 = sadd.s32 %s18, 1
      %s26 = ssub.s32 %s18, %s25
      %p27 = scmp.eq.s32.totalorder %s26, 0
      %s29 = sadd.s32 %s28, 1
      %s30 = scalar_select %p27, %s28, %s29
      %p33 = pneg %p27
      %p34 = scmp.eq.s32.totalorder %s18, 1
      %p35 = por %p33, %p34
      %p36 = scmp.ne.s32.totalorder %s28, %s31
      %p37 = scmp.eq.s32.totalorder %s18, 0
      %p38 = por %p36, %p37
      %p39 = scmp.ne.s32.totalorder %s28, %s31
      %p40 = scmp.eq.s32.totalorder %s23, 1
      %p41 = por %p39, %p40
      %p42 = scmp.ne.s32.totalorder %s31, %s32
      %p43 = scmp.eq.s32.totalorder %s23, 0
      %p44 = por %p42, %p43
      %p45 = scmp.ne.s32.totalorder %s31, %s32
      %p46 = scmp.eq.s32.totalorder %s24, 1
      %p47 = por %p45, %p46
      %p49 = scmp.ne.s32.totalorder %s32, %s48
      %p50 = scmp.eq.s32.totalorder %s24, 0
      %p51 = por %p49, %p50
      %s53 = sadd.s32 %s52, 1
      %p56 = scmp.eq.s32.totalorder %s18, 1
      %p57 = scmp.ne.s32.totalorder %s52, %s54
      %p58 = scmp.eq.s32.totalorder %s18, 0
      %p59 = por %p57, %p58
      %p60 = scmp.ne.s32.totalorder %s52, %s54
      %p61 = scmp.eq.s32.totalorder %s23, 1
      %p62 = por %p60, %p61
      %p63 = scmp.ne.s32.totalorder %s54, %s55
      %p64 = scmp.eq.s32.totalorder %s23, 0
      %p65 = por %p63, %p64
      %p66 = scmp.ne.s32.totalorder %s54, %s55
      %p67 = scmp.eq.s32.totalorder %s24, 1
      %p68 = por %p66, %p67
      %p70 = scmp.ne.s32.totalorder %s55, %s69
      %p71 = scmp.eq.s32.totalorder %s24, 0
      %p72 = por %p70, %p71
      %s74 = sadd.s32 %s73, 1
      %p77 = scmp.eq.s32.totalorder %s18, 1
      %p78 = scmp.ne.s32.totalorder %s73, %s75
      %p79 = scmp.eq.s32.totalorder %s18, 0
      %p80 = por %p78, %p79
      %p81 = scmp.ne.s32.totalorder %s73, %s75
      %p82 = scmp.eq.s32.totalorder %s23, 1
      %p83 = por %p81, %p82
      %p84 = scmp.ne.s32.totalorder %s75, %s76
      %p85 = scmp.eq.s32.totalorder %s23, 0
      %p86 = por %p84, %p85
      %p87 = scmp.ne.s32.totalorder %s75, %s76
      %p88 = scmp.eq.s32.totalorder %s24, 1
      %p89 = por %p87, %p88
      %p91 = scmp.ne.s32.totalorder %s76, %s90
      %p92 = scmp.eq.s32.totalorder %s24, 0
      %p93 = por %p91, %p92
      %s95 = sadd.s32 %s94, 1
      %p98 = scmp.eq.s32.totalorder %s18, 1
      %p99 = scmp.ne.s32.totalorder %s94, %s96
      %p100 = scmp.eq.s32.totalorder %s18, 0
      %p101 = por %p99, %p100
      %p102 = scmp.ne.s32.totalorder %s94, %s96
      %p103 = scmp.eq.s32.totalorder %s23, 1
      %p104 = por %p102, %p103
      %p105 = scmp.ne.s32.totalorder %s96, %s97
      %p106 = scmp.eq.s32.totalorder %s23, 0
      %p107 = por %p105, %p106
      %p108 = scmp.ne.s32.totalorder %s96, %s97
      %p109 = scmp.eq.s32.totalorder %s24, 1
      %p110 = por %p108, %p109
      %p112 = scmp.ne.s32.totalorder %s97, %s111
      %p113 = scmp.eq.s32.totalorder %s24, 0
      %p114 = por %p112, %p113
      %s116 = sadd.s32 %s115, 1
      %p119 = scmp.eq.s32.totalorder %s18, 1
      %p120 = scmp.ne.s32.totalorder %s115, %s117
      %p121 = scmp.eq.s32.totalorder %s18, 0
      %p122 = por %p120, %p121
      %p123 = scmp.ne.s32.totalorder %s115, %s117
      %p124 = scmp.eq.s32.totalorder %s23, 1
      %p125 = por %p123, %p124
      %p126 = scmp.ne.s32.totalorder %s117, %s118
      %p127 = scmp.eq.s32.totalorder %s23, 0
      %p128 = por %p126, %p127
      %p129 = scmp.ne.s32.totalorder %s117, %s118
      %p130 = scmp.eq.s32.totalorder %s24, 1
      %p131 = por %p129, %p130
      %p133 = scmp.ne.s32.totalorder %s118, %s132
      %p134 = scmp.eq.s32.totalorder %s24, 0
      %p135 = por %p133, %p134
      %s136 = ssub.s32 %s18, %s25
      %p137 = scmp.eq.s32.totalorder %s136, 0
      %s139 = sadd.s32 %s138, 1
      %s140 = scalar_select %p137, %s138, %s139
      %p143 = pneg %p137
      %p144 = scmp.eq.s32.totalorder %s18, 1
      %p145 = por %p143, %p144
      %p146 = scmp.ne.s32.totalorder %s138, %s141
      %p147 = scmp.eq.s32.totalorder %s18, 0
      %p148 = por %p146, %p147
      %p149 = scmp.ne.s32.totalorder %s138, %s141
      %p150 = scmp.eq.s32.totalorder %s23, 1
      %p151 = por %p149, %p150
      %p152 = scmp.ne.s32.totalorder %s141, %s142
      %p153 = scmp.eq.s32.totalorder %s23, 0
      %p154 = por %p152, %p153
      %p155 = scmp.ne.s32.totalorder %s141, %s142
      %p156 = scmp.eq.s32.totalorder %s24, 1
      %p157 = por %p155, %p156
      %p159 = scmp.ne.s32.totalorder %s142, %s158
      %p160 = scmp.eq.s32.totalorder %s24, 0
      %p161 = por %p159, %p160
      %p162 = scmp.le.s32.totalorder 1, %s18
      %p163 = scmp.lt.s32.totalorder %s18, 3
      %p164 = pnand %p162, %p163
      %p165 = pneg %p164
      // Predicated region
      $region9: #{feed_forward.1} parent=5 // pred_check
        _
      $region10: #{feed_forward.1} parent=5 // pred_check_branch
        %167 = sbr.rel (%p164) target = $region12
      $region11: #{feed_forward.1} parent=5 // pred_region
        %s168 = ssub.s32 %s18, 1
        // Predicated region
        $region13: #{feed_forward.1} parent=11 // pred_check
          %p169 = pneg %p65
        $region14: #{feed_forward.1} parent=11 // pred_check_branch
          %171 = sbr.rel (%p169) target = $region16
        $region15: #{feed_forward.1} parent=11 // pred_region
          %s173 = ssub.s32 8192, 8192
          %174 = vsyncadd [#allocation6], %s173
          %s175 = sshll.u32 [#allocation5], 4
          %s176 = int_to_ptr.vmem [resolvable:$true] %s175
          %181 = dma.hbm_to_vmem [thread:$0]  %s1, 8192, %s176, [#allocation6], 128, 128, 8
        $region16: #{feed_forward.1} parent=11 // pred_fallthru
          _
        // Predicated region
        $region17: #{feed_forward.1} parent=11 // pred_check
          %p182 = pneg %p86
        $region18: #{feed_forward.1} parent=11 // pred_check_branch
          %184 = sbr.rel (%p182) target = $region20
        $region19: #{feed_forward.1} parent=11 // pred_region
          _
        $region20: #{feed_forward.1} parent=11 // pred_fallthru
          _
        // Predicated region
        $region21: #{feed_forward.1} parent=11 // pred_check
          %p185 = pneg %p107
        $region22: #{feed_forward.1} parent=11 // pred_check_branch
          %187 = sbr.rel (%p185) target = $region24
        $region23: #{feed_forward.1} parent=11 // pred_region
          %s189 = ssub.s32 8192, 8192
          %190 = vsyncadd [#allocation6], %s189
          %s191 = sshll.u32 [#allocation7], 4
          %s192 = int_to_ptr.vmem [resolvable:$true] %s191
          %197 = dma.hbm_to_vmem [thread:$0]  %s3, 8192, %s192, [#allocation6], 512, 512, 32
        $region24: #{feed_forward.1} parent=11 // pred_fallthru
          _
        // Predicated region
        $region25: #{feed_forward.1} parent=11 // pred_check
          %p198 = pneg %p128
        $region26: #{feed_forward.1} parent=11 // pred_check_branch
          %200 = sbr.rel (%p198) target = $region28
        $region27: #{feed_forward.1} parent=11 // pred_region
          _
        $region28: #{feed_forward.1} parent=11 // pred_fallthru
          _
      $region12: #{feed_forward.1} parent=5 // pred_fallthru
        _
      %p201 = scmp.lt.s32.totalorder %s18, 2
      // Predicated region
      $region29: #{feed_forward.1} parent=5 // pred_check
        %p202 = pneg %p201
      $region30: #{feed_forward.1} parent=5 // pred_check_branch
        %204 = sbr.rel (%p202) target = $region32
      $region31: #{feed_forward.1} parent=5 // pred_region
        // Predicated region
        $region33: #{feed_forward.1} parent=31 // pred_check
          %p205 = pneg %p38
        $region34: #{feed_forward.1} parent=31 // pred_check_branch
          %207 = sbr.rel (%p205) target = $region36
        $region35: #{feed_forward.1} parent=31 // pred_region
          %s208 = sand.u32 %s28, 1
          %s209 = scalar_lea.sflag [#allocation3], %s208
          %s210 = sand.u32 %s28, 1
          %s211 = smul.addr %s210, 32
          %s212 = scalar_lea.vmem [#allocation2], %s211
          %s214 = ssub.s32 512, 512
          %215 = vsyncadd %s209, %s214
          %s216 = smul.addr %s18, 4
          %s217 = smul.addr %s216, 128
          %s218 = scalar_lea.hbm %s0, %s217
          %s220 = sshll.u32 %s212, 4
          %s221 = int_to_ptr.vmem [resolvable:$true] %s220
          %223 = dma.hbm_to_vmem [thread:$0]  %s218, 512, %s221, %s209
        $region36: #{feed_forward.1} parent=31 // pred_fallthru
          _
      $region32: #{feed_forward.1} parent=5 // pred_fallthru
        _
      %p224 = scmp.le.s32.totalorder 1, %s18
      %p225 = scmp.lt.s32.totalorder %s18, 3
      %p226 = pnand %p224, %p225
      %p227 = pneg %p226
      // Predicated region
      $region37: #{feed_forward.1} parent=5 // pred_check
        _
      $region38: #{feed_forward.1} parent=5 // pred_check_branch
        %229 = sbr.rel (%p226) target = $region40
      $region39: #{feed_forward.1} parent=5 // pred_region
        %s230 = ssub.s32 %s18, 1
        %s231 = sand.u32 %s31, 1
        %s232 = scalar_lea.sflag [#allocation3], %s231
        %s233 = sand.u32 %s31, 1
        %s234 = smul.addr %s233, 32
        %s235 = scalar_lea.vmem [#allocation2], %s234
        // Predicated region
        $region41: #{feed_forward.1} parent=39 // pred_check
          %p236 = pneg %p44
        $region42: #{feed_forward.1} parent=39 // pred_check_branch
          %238 = sbr.rel (%p236) target = $region44
        $region43: #{feed_forward.1} parent=39 // pred_region
          %239 = dma.done %s232, 512
        $region44: #{feed_forward.1} parent=39 // pred_fallthru
          _
        // Predicated region
        $region45: #{feed_forward.1} parent=39 // pred_check
          %p240 = pneg %p65
        $region46: #{feed_forward.1} parent=39 // pred_check_branch
          %242 = sbr.rel (%p240) target = $region48
        $region47: #{feed_forward.1} parent=39 // pred_region
          %243 = dma.done [#allocation6], 8192
        $region48: #{feed_forward.1} parent=39 // pred_fallthru
          _
        // Predicated region
        $region49: #{feed_forward.1} parent=39 // pred_check
          %p244 = pneg %p107
        $region50: #{feed_forward.1} parent=39 // pred_check_branch
          %246 = sbr.rel (%p244) target = $region52
        $region51: #{feed_forward.1} parent=39 // pred_region
          %247 = dma.done [#allocation6], 8192
        $region52: #{feed_forward.1} parent=39 // pred_fallthru
          _
        %s248 = sand.u32 %s31, 1
        %s249 = scalar_lea.sflag [#allocation3], %s248
        %s250 = sand.u32 %s31, 1
        %s251 = smul.addr %s250, 32
        %s252 = scalar_lea.vmem [#allocation2], %s251
        %p253 = pneg %p44
        %p254 = pneg %p41
        %p255 = pneg %p65
        %p256 = pneg %p62
        %p257 = pneg %p86
        %p258 = pneg %p83
        %p259 = pneg %p107
        %p260 = pneg %p104
        %p261 = pneg %p128
        %p262 = pneg %p125
        %p263 = pneg %p154
        %p264 = pneg %p151
        %s265 = sand.u32 %s141, 1
        %s266 = scalar_lea.sflag [#allocation4], %s265
        %s267 = sand.u32 %s141, 1
        %s268 = smul.addr %s267, 32
        %s269 = scalar_lea.vmem [#allocation8], %s268
        %v270 = vld [vmem:[%s235] sm:$0xff]
        %v271 = vld [vmem:[%s235 + $0x8] sm:$0xff]
        %v272 = vld [vmem:[%s235 + $0x10] sm:$0xff]
        %v273 = vld [vmem:[%s235 + $0x18] sm:$0xff]
        %v274 = vld [vmem:[#allocation5] sm:$0xff]
        %v275 = vld [vmem:[#allocation5 + $0x8] sm:$0xff]
        %v276 = vld [vmem:[#allocation5 + $0x10] sm:$0xff]
        %v277 = vld [vmem:[#allocation5 + $0x18] sm:$0xff]
        %v278 = vld [vmem:[#allocation5 + $0x20] sm:$0xff]
        %v279 = vld [vmem:[#allocation5 + $0x28] sm:$0xff]
        %v280 = vld [vmem:[#allocation5 + $0x30] sm:$0xff]
        %v281 = vld [vmem:[#allocation5 + $0x38] sm:$0xff]
        %v282 = vld [vmem:[#allocation5 + $0x40] sm:$0xff]
        %v283 = vld [vmem:[#allocation5 + $0x48] sm:$0xff]
        %v284 = vld [vmem:[#allocation5 + $0x50] sm:$0xff]
        %v285 = vld [vmem:[#allocation5 + $0x58] sm:$0xff]
        %v286 = vld [vmem:[#allocation5 + $0x60] sm:$0xff]
        %v287 = vld [vmem:[#allocation5 + $0x68] sm:$0xff]
        %v288 = vld [vmem:[#allocation5 + $0x70] sm:$0xff]
        %v289 = vld [vmem:[#allocation5 + $0x78] sm:$0xff]
        %v290 = vld [vmem:[#allocation5 + $0x80] sm:$0xff]
        %v291 = vld [vmem:[#allocation5 + $0x88] sm:$0xff]
        %v292 = vld [vmem:[#allocation5 + $0x90] sm:$0xff]
        %v293 = vld [vmem:[#allocation5 + $0x98] sm:$0xff]
        %v294 = vld [vmem:[#allocation5 + $0xa0] sm:$0xff]
        %v295 = vld [vmem:[#allocation5 + $0xa8] sm:$0xff]
        %v296 = vld [vmem:[#allocation5 + $0xb0] sm:$0xff]
        %v297 = vld [vmem:[#allocation5 + $0xb8] sm:$0xff]
        %v298 = vld [vmem:[#allocation5 + $0xc0] sm:$0xff]
        %v299 = vld [vmem:[#allocation5 + $0xc8] sm:$0xff]
        %v300 = vld [vmem:[#allocation5 + $0xd0] sm:$0xff]
        %v301 = vld [vmem:[#allocation5 + $0xd8] sm:$0xff]
        %v302 = vld [vmem:[#allocation5 + $0xe0] sm:$0xff]
        %v303 = vld [vmem:[#allocation5 + $0xe8] sm:$0xff]
        %v304 = vld [vmem:[#allocation5 + $0xf0] sm:$0xff]
        %v305 = vld [vmem:[#allocation5 + $0xf8] sm:$0xff]
        %v306 = vld [vmem:[#allocation5 + $0x100] sm:$0xff]
        %v307 = vld [vmem:[#allocation5 + $0x108] sm:$0xff]
        %v308 = vld [vmem:[#allocation5 + $0x110] sm:$0xff]
        %v309 = vld [vmem:[#allocation5 + $0x118] sm:$0xff]
        %v310 = vld [vmem:[#allocation5 + $0x120] sm:$0xff]
        %v311 = vld [vmem:[#allocation5 + $0x128] sm:$0xff]
        %v312 = vld [vmem:[#allocation5 + $0x130] sm:$0xff]
        %v313 = vld [vmem:[#allocation5 + $0x138] sm:$0xff]
        %v314 = vld [vmem:[#allocation5 + $0x140] sm:$0xff]
        %v315 = vld [vmem:[#allocation5 + $0x148] sm:$0xff]
        %v316 = vld [vmem:[#allocation5 + $0x150] sm:$0xff]
        %v317 = vld [vmem:[#allocation5 + $0x158] sm:$0xff]
        %v318 = vld [vmem:[#allocation5 + $0x160] sm:$0xff]
        %v319 = vld [vmem:[#allocation5 + $0x168] sm:$0xff]
        %v320 = vld [vmem:[#allocation5 + $0x170] sm:$0xff]
        %v321 = vld [vmem:[#allocation5 + $0x178] sm:$0xff]
        %v322 = vld [vmem:[#allocation5 + $0x180] sm:$0xff]
        %v323 = vld [vmem:[#allocation5 + $0x188] sm:$0xff]
        %v324 = vld [vmem:[#allocation5 + $0x190] sm:$0xff]
        %v325 = vld [vmem:[#allocation5 + $0x198] sm:$0xff]
        %v326 = vld [vmem:[#allocation5 + $0x1a0] sm:$0xff]
        %v327 = vld [vmem:[#allocation5 + $0x1a8] sm:$0xff]
        %v328 = vld [vmem:[#allocation5 + $0x1b0] sm:$0xff]
        %v329 = vld [vmem:[#allocation5 + $0x1b8] sm:$0xff]
        %v330 = vld [vmem:[#allocation5 + $0x1c0] sm:$0xff]
        %v331 = vld [vmem:[#allocation5 + $0x1c8] sm:$0xff]
        %v332 = vld [vmem:[#allocation5 + $0x1d0] sm:$0xff]
        %v333 = vld [vmem:[#allocation5 + $0x1d8] sm:$0xff]
        %v334 = vld [vmem:[#allocation5 + $0x1e0] sm:$0xff]
        %v335 = vld [vmem:[#allocation5 + $0x1e8] sm:$0xff]
        %v336 = vld [vmem:[#allocation5 + $0x1f0] sm:$0xff]
        %v337 = vld [vmem:[#allocation5 + $0x1f8] sm:$0xff]
        %v338 = vld [vmem:[%s2] sm:$0x1]
        %v340 = vlaneseq
        %v341 = vshrl.u32 %v340, 7
        %v342 = vsub.s32 0, %v341
        %v343 = vrot.slane %v338, %v342
        %345 = vmatprep.subr.mxu0 0.0
        %346 = vmatpush1.msra.mxu0 %v274
        %347 = vmatprep.subr.mxu0 0.0
        %348 = vmatpush1.msra.mxu0 %v275
        %349 = vmatprep.subr.mxu0 0.0
        %350 = vmatpush1.msra.mxu0 %v276
        %351 = vmatprep.subr.mxu0 0.0
        %352 = vmatpush1.msra.mxu0 %v277
        %353 = vmatprep.subr.mxu0 0.0
        %354 = vmatpush1.msra.mxu0 %v278
        %355 = vmatprep.subr.mxu0 0.0
        %356 = vmatpush1.msra.mxu0 %v279
        %357 = vmatprep.subr.mxu0 0.0
        %358 = vmatpush1.msra.mxu0 %v280
        %359 = vmatprep.subr.mxu0 0.0
        %360 = vmatpush1.msra.mxu0 %v281
        %361 = vmatprep.subr.mxu0 0.0
        %362 = vmatpush1.msra.mxu0 %v282
        %363 = vmatprep.subr.mxu0 0.0
        %364 = vmatpush1.msra.mxu0 %v283
        %365 = vmatprep.subr.mxu0 0.0
        %366 = vmatpush1.msra.mxu0 %v284
        %367 = vmatprep.subr.mxu0 0.0
        %368 = vmatpush1.msra.mxu0 %v285
        %369 = vmatprep.subr.mxu0 0.0
        %370 = vmatpush1.msra.mxu0 %v286
        %371 = vmatprep.subr.mxu0 0.0
        %372 = vmatpush1.msra.mxu0 %v287
        %373 = vmatprep.subr.mxu0 0.0
        %374 = vmatpush1.msra.mxu0 %v288
        %375 = vmatprep.subr.mxu0 0.0
        %376 = vmatpush1.msra.mxu0 %v289
        %377 = vmatprep.subr.mxu0 0.0
        %378 = vmatpush1.msra.mxu0 %v290
        %379 = vmatprep.subr.mxu0 0.0
        %380 = vmatpush1.msra.mxu0 %v291
        %381 = vmatprep.subr.mxu0 0.0
        %382 = vmatpush1.msra.mxu0 %v292
        %383 = vmatprep.subr.mxu0 0.0
        %384 = vmatpush1.msra.mxu0 %v293
        %385 = vmatprep.subr.mxu0 0.0
        %386 = vmatpush1.msra.mxu0 %v294
        %387 = vmatprep.subr.mxu0 0.0
        %388 = vmatpush1.msra.mxu0 %v295
        %389 = vmatprep.subr.mxu0 0.0
        %390 = vmatpush1.msra.mxu0 %v296
        %391 = vmatprep.subr.mxu0 0.0
        %392 = vmatpush1.msra.mxu0 %v297
        %393 = vmatprep.subr.mxu0 0.0
        %394 = vmatpush1.msra.mxu0 %v298
        %395 = vmatprep.subr.mxu0 0.0
        %396 = vmatpush1.msra.mxu0 %v299
        %397 = vmatprep.subr.mxu0 0.0
        %398 = vmatpush1.msra.mxu0 %v300
        %399 = vmatprep.subr.mxu0 0.0
        %400 = vmatpush1.msra.mxu0 %v301
        %401 = vmatprep.subr.mxu0 0.0
        %402 = vmatpush1.msra.mxu0 %v302
        %403 = vmatprep.subr.mxu0 0.0
        %404 = vmatpush1.msra.mxu0 %v303
        %405 = vmatprep.subr.mxu0 0.0
        %406 = vmatpush1.msra.mxu0 %v304
        %407 = vmatprep.subr.mxu0 0.0
        %408 = vmatpush1.msra.mxu0 %v305
        %409 = vmatprep.mubr.f32.mxu0 %v271
        %410 = vmatmul.mubr.f32.gmra.mrb[0].mxu0 %v270
        %v411 = vpop.f32.mrb[0].mxu0
        %v412 = vadd.f32 %v343, %v411
        %v413 = vpop.f32.mrb[0].mxu0
        %414 = vdwg.mxu0
        %415 = vmatprep.subr.mxu0 0.0
        %416 = vmatpush1.msra.mxu0 %v306
        %417 = vmatprep.subr.mxu0 0.0
        %418 = vmatpush1.msra.mxu0 %v307
        %419 = vmatprep.subr.mxu0 0.0
        %420 = vmatpush1.msra.mxu0 %v308
        %421 = vmatprep.subr.mxu0 0.0
        %422 = vmatpush1.msra.mxu0 %v309
        %423 = vmatprep.subr.mxu0 0.0
        %424 = vmatpush1.msra.mxu0 %v310
        %425 = vmatprep.subr.mxu0 0.0
        %426 = vmatpush1.msra.mxu0 %v311
        %427 = vmatprep.subr.mxu0 0.0
        %428 = vmatpush1.msra.mxu0 %v312
        %429 = vmatprep.subr.mxu0 0.0
        %430 = vmatpush1.msra.mxu0 %v313
        %431 = vmatprep.subr.mxu0 0.0
        %432 = vmatpush1.msra.mxu0 %v314
        %433 = vmatprep.subr.mxu0 0.0
        %434 = vmatpush1.msra.mxu0 %v315
        %435 = vmatprep.subr.mxu0 0.0
        %436 = vmatpush1.msra.mxu0 %v316
        %437 = vmatprep.subr.mxu0 0.0
        %438 = vmatpush1.msra.mxu0 %v317
        %439 = vmatprep.subr.mxu0 0.0
        %440 = vmatpush1.msra.mxu0 %v318
        %441 = vmatprep.subr.mxu0 0.0
        %442 = vmatpush1.msra.mxu0 %v319
        %443 = vmatprep.subr.mxu0 0.0
        %444 = vmatpush1.msra.mxu0 %v320
        %445 = vmatprep.subr.mxu0 0.0
        %446 = vmatpush1.msra.mxu0 %v321
        %447 = vmatprep.subr.mxu0 0.0
        %448 = vmatpush1.msra.mxu0 %v322
        %449 = vmatprep.subr.mxu0 0.0
        %450 = vmatpush1.msra.mxu0 %v323
        %451 = vmatprep.subr.mxu0 0.0
        %452 = vmatpush1.msra.mxu0 %v324
        %453 = vmatprep.subr.mxu0 0.0
        %454 = vmatpush1.msra.mxu0 %v325
        %455 = vmatprep.subr.mxu0 0.0
        %456 = vmatpush1.msra.mxu0 %v326
        %457 = vmatprep.subr.mxu0 0.0
        %458 = vmatpush1.msra.mxu0 %v327
        %459 = vmatprep.subr.mxu0 0.0
        %460 = vmatpush1.msra.mxu0 %v328
        %461 = vmatprep.subr.mxu0 0.0
        %462 = vmatpush1.msra.mxu0 %v329
        %463 = vmatprep.subr.mxu0 0.0
        %464 = vmatpush1.msra.mxu0 %v330
        %465 = vmatprep.subr.mxu0 0.0
        %466 = vmatpush1.msra.mxu0 %v331
        %467 = vmatprep.subr.mxu0 0.0
        %468 = vmatpush1.msra.mxu0 %v332
        %469 = vmatprep.subr.mxu0 0.0
        %470 = vmatpush1.msra.mxu0 %v333
        %471 = vmatprep.subr.mxu0 0.0
        %472 = vmatpush1.msra.mxu0 %v334
        %473 = vmatprep.subr.mxu0 0.0
        %474 = vmatpush1.msra.mxu0 %v335
        %475 = vmatprep.subr.mxu0 0.0
        %476 = vmatpush1.msra.mxu0 %v336
        %477 = vmatprep.subr.mxu0 0.0
        %478 = vmatpush1.msra.mxu0 %v337
        %479 = vmatprep.mubr.f32.mxu0 %v273
        %480 = vmatmul.mubr.f32.gmra.mrb[0].mxu0 %v272
        %v481 = vpop.f32.mrb[0].mxu0
        %v482 = vadd.f32 %v412, %v481
        %v483 = vpop.f32.mrb[0].mxu0
        %484 = vdwg.mxu0
        %v485 = vxor.u32 %v482, 2147483648
        %v486 = vmul.f32 %v485, 1.442695
        %v487 = vpow.pop %v486
        %v488 = vadd.f32 %v487, 1.0
        %v489 = vrcp.pop %v488
        %v490 = vmul.f32 1.0, %v489
        %v491 = vmul.f32 %v482, %v490
        %v492 = vld [vmem:[#allocation7] sm:$0xff]
        %v493 = vld [vmem:[#allocation7 + $0x8] sm:$0xff]
        %v494 = vld [vmem:[#allocation7 + $0x10] sm:$0xff]
        %v495 = vld [vmem:[#allocation7 + $0x18] sm:$0xff]
        %v496 = vld [vmem:[#allocation7 + $0x20] sm:$0xff]
        %v497 = vld [vmem:[#allocation7 + $0x28] sm:$0xff]
        %v498 = vld [vmem:[#allocation7 + $0x30] sm:$0xff]
        %v499 = vld [vmem:[#allocation7 + $0x38] sm:$0xff]
        %v500 = vld [vmem:[#allocation7 + $0x40] sm:$0xff]
        %v501 = vld [vmem:[#allocation7 + $0x48] sm:$0xff]
        %v502 = vld [vmem:[#allocation7 + $0x50] sm:$0xff]
        %v503 = vld [vmem:[#allocation7 + $0x58] sm:$0xff]
        %v504 = vld [vmem:[#allocation7 + $0x60] sm:$0xff]
        %v505 = vld [vmem:[#allocation7 + $0x68] sm:$0xff]
        %v506 = vld [vmem:[#allocation7 + $0x70] sm:$0xff]
        %v507 = vld [vmem:[#allocation7 + $0x78] sm:$0xff]
        %v508 = vld [vmem:[#allocation7 + $0x80] sm:$0xff]
        %v509 = vld [vmem:[#allocation7 + $0x88] sm:$0xff]
        %v510 = vld [vmem:[#allocation7 + $0x90] sm:$0xff]
        %v511 = vld [vmem:[#allocation7 + $0x98] sm:$0xff]
        %v512 = vld [vmem:[#allocation7 + $0xa0] sm:$0xff]
        %v513 = vld [vmem:[#allocation7 + $0xa8] sm:$0xff]
        %v514 = vld [vmem:[#allocation7 + $0xb0] sm:$0xff]
        %v515 = vld [vmem:[#allocation7 + $0xb8] sm:$0xff]
        %v516 = vld [vmem:[#allocation7 + $0xc0] sm:$0xff]
        %v517 = vld [vmem:[#allocation7 + $0xc8] sm:$0xff]
        %v518 = vld [vmem:[#allocation7 + $0xd0] sm:$0xff]
        %v519 = vld [vmem:[#allocation7 + $0xd8] sm:$0xff]
        %v520 = vld [vmem:[#allocation7 + $0xe0] sm:$0xff]
        %v521 = vld [vmem:[#allocation7 + $0xe8] sm:$0xff]
        %v522 = vld [vmem:[#allocation7 + $0xf0] sm:$0xff]
        %v523 = vld [vmem:[#allocation7 + $0xf8] sm:$0xff]
        %v524 = vld [vmem:[#allocation7 + $0x100] sm:$0xff]
        %v525 = vld [vmem:[#allocation7 + $0x108] sm:$0xff]
        %v526 = vld [vmem:[#allocation7 + $0x110] sm:$0xff]
        %v527 = vld [vmem:[#allocation7 + $0x118] sm:$0xff]
        %v528 = vld [vmem:[#allocation7 + $0x120] sm:$0xff]
        %v529 = vld [vmem:[#allocation7 + $0x128] sm:$0xff]
        %v530 = vld [vmem:[#allocation7 + $0x130] sm:$0xff]
        %v531 = vld [vmem:[#allocation7 + $0x138] sm:$0xff]
        %v532 = vld [vmem:[#allocation7 + $0x140] sm:$0xff]
        %v533 = vld [vmem:[#allocation7 + $0x148] sm:$0xff]
        %v534 = vld [vmem:[#allocation7 + $0x150] sm:$0xff]
        %v535 = vld [vmem:[#allocation7 + $0x158] sm:$0xff]
        %v536 = vld [vmem:[#allocation7 + $0x160] sm:$0xff]
        %v537 = vld [vmem:[#allocation7 + $0x168] sm:$0xff]
        %v538 = vld [vmem:[#allocation7 + $0x170] sm:$0xff]
        %v539 = vld [vmem:[#allocation7 + $0x178] sm:$0xff]
        %v540 = vld [vmem:[#allocation7 + $0x180] sm:$0xff]
        %v541 = vld [vmem:[#allocation7 + $0x188] sm:$0xff]
        %v542 = vld [vmem:[#allocation7 + $0x190] sm:$0xff]
        %v543 = vld [vmem:[#allocation7 + $0x198] sm:$0xff]
        %v544 = vld [vmem:[#allocation7 + $0x1a0] sm:$0xff]
        %v545 = vld [vmem:[#allocation7 + $0x1a8] sm:$0xff]
        %v546 = vld [vmem:[#allocation7 + $0x1b0] sm:$0xff]
        %v547 = vld [vmem:[#allocation7 + $0x1b8] sm:$0xff]
        %v548 = vld [vmem:[#allocation7 + $0x1c0] sm:$0xff]
        %v549 = vld [vmem:[#allocation7 + $0x1c8] sm:$0xff]
        %v550 = vld [vmem:[#allocation7 + $0x1d0] sm:$0xff]
        %v551 = vld [vmem:[#allocation7 + $0x1d8] sm:$0xff]
        %v552 = vld [vmem:[#allocation7 + $0x1e0] sm:$0xff]
        %v553 = vld [vmem:[#allocation7 + $0x1e8] sm:$0xff]
        %v554 = vld [vmem:[#allocation7 + $0x1f0] sm:$0xff]
        %v555 = vld [vmem:[#allocation7 + $0x1f8] sm:$0xff]
        %v556 = vld [vmem:[%s4] sm:$0xf]
        %v558 = vlaneseq
        %v559 = vshrl.u32 %v558, 7
        %v560 = vsub.s32 0, %v559
        %v561 = vrot.slane %v556, %v560
        %v562 = vlaneseq
        %v563 = vshrl.u32 %v562, 7
        %v564 = vsub.s32 1, %v563
        %v565 = vrot.slane %v556, %v564
        %v566 = vlaneseq
        %v567 = vshrl.u32 %v566, 7
        %v568 = vsub.s32 2, %v567
        %v569 = vrot.slane %v556, %v568
        %v570 = vlaneseq
        %v571 = vshrl.u32 %v570, 7
        %v572 = vsub.s32 3, %v571
        %v573 = vrot.slane %v556, %v572
        %578 = vmatprep.subr.mxu0 %v493
        %579 = vmatpush1.msra.mxu0 %v492
        %580 = vmatprep.subr.mxu0 %v497
        %581 = vmatpush1.msra.mxu0 %v496
        %582 = vmatprep.subr.mxu0 %v501
        %583 = vmatpush1.msra.mxu0 %v500
        %584 = vmatprep.subr.mxu0 %v505
        %585 = vmatpush1.msra.mxu0 %v504
        %586 = vmatprep.subr.mxu0 %v509
        %587 = vmatpush1.msra.mxu0 %v508
        %588 = vmatprep.subr.mxu0 %v513
        %589 = vmatpush1.msra.mxu0 %v512
        %590 = vmatprep.subr.mxu0 %v517
        %591 = vmatpush1.msra.mxu0 %v516
        %592 = vmatprep.subr.mxu0 %v521
        %593 = vmatpush1.msra.mxu0 %v520
        %594 = vmatprep.subr.mxu0 %v525
        %595 = vmatpush1.msra.mxu0 %v524
        %596 = vmatprep.subr.mxu0 %v529
        %597 = vmatpush1.msra.mxu0 %v528
        %598 = vmatprep.subr.mxu0 %v533
        %599 = vmatpush1.msra.mxu0 %v532
        %600 = vmatprep.subr.mxu0 %v537
        %601 = vmatpush1.msra.mxu0 %v536
        %602 = vmatprep.subr.mxu0 %v541
        %603 = vmatpush1.msra.mxu0 %v540
        %604 = vmatprep.subr.mxu0 %v545
        %605 = vmatpush1.msra.mxu0 %v544
        %606 = vmatprep.subr.mxu0 %v549
        %607 = vmatpush1.msra.mxu0 %v548
        %608 = vmatprep.subr.mxu0 %v553
        %609 = vmatpush1.msra.mxu0 %v552
        %610 = vmatprep.subr.mxu0 0.0
        %611 = vmatpush1.msra.mxu0 0.0
        %612 = vmatprep.subr.mxu0 0.0
        %613 = vmatpush1.msra.mxu0 0.0
        %614 = vmatprep.subr.mxu0 0.0
        %615 = vmatpush1.msra.mxu0 0.0
        %616 = vmatprep.subr.mxu0 0.0
        %617 = vmatpush1.msra.mxu0 0.0
        %618 = vmatprep.subr.mxu0 0.0
        %619 = vmatpush1.msra.mxu0 0.0
        %620 = vmatprep.subr.mxu0 0.0
        %621 = vmatpush1.msra.mxu0 0.0
        %622 = vmatprep.subr.mxu0 0.0
        %623 = vmatpush1.msra.mxu0 0.0
        %624 = vmatprep.subr.mxu0 0.0
        %625 = vmatpush1.msra.mxu0 0.0
        %626 = vmatprep.subr.mxu0 0.0
        %627 = vmatpush1.msra.mxu0 0.0
        %628 = vmatprep.subr.mxu0 0.0
        %629 = vmatpush1.msra.mxu0 0.0
        %630 = vmatprep.subr.mxu0 0.0
        %631 = vmatpush1.msra.mxu0 0.0
        %632 = vmatprep.subr.mxu0 0.0
        %633 = vmatpush1.msra.mxu0 0.0
        %634 = vmatprep.subr.mxu0 0.0
        %635 = vmatpush1.msra.mxu0 0.0
        %636 = vmatprep.subr.mxu0 0.0
        %637 = vmatpush1.msra.mxu0 0.0
        %638 = vmatprep.subr.mxu0 0.0
        %639 = vmatpush1.msra.mxu0 0.0
        %640 = vmatprep.subr.mxu0 0.0
        %641 = vmatpush1.msra.mxu0 0.0
        %642 = vmatprep.mubr.f32.mxu0 0.0
        %643 = vmatmul.mubr.f32.gmra.mrb[0].mxu0 %v491
        %v644 = vpop.f32.mrb[0].mxu0
        %v645 = vadd.f32 %v561, %v644
        %v646 = vpop.f32.mrb[0].mxu0
        %v647 = vadd.f32 %v565, %v646
        %648 = vdwg.mxu0
        %649 = vmatprep.subr.mxu0 %v495
        %650 = vmatpush1.msra.mxu0 %v494
        %651 = vmatprep.subr.mxu0 %v499
        %652 = vmatpush1.msra.mxu0 %v498
        %653 = vmatprep.subr.mxu0 %v503
        %654 = vmatpush1.msra.mxu0 %v502
        %655 = vmatprep.subr.mxu0 %v507
        %656 = vmatpush1.msra.mxu0 %v506
        %657 = vmatprep.subr.mxu0 %v511
        %658 = vmatpush1.msra.mxu0 %v510
        %659 = vmatprep.subr.mxu0 %v515
        %660 = vmatpush1.msra.mxu0 %v514
        %661 = vmatprep.subr.mxu0 %v519
        %662 = vmatpush1.msra.mxu0 %v518
        %663 = vmatprep.subr.mxu0 %v523
        %664 = vmatpush1.msra.mxu0 %v522
        %665 = vmatprep.subr.mxu0 %v527
        %666 = vmatpush1.msra.mxu0 %v526
        %667 = vmatprep.subr.mxu0 %v531
        %668 = vmatpush1.msra.mxu0 %v530
        %669 = vmatprep.subr.mxu0 %v535
        %670 = vmatpush1.msra.mxu0 %v534
        %671 = vmatprep.subr.mxu0 %v539
        %672 = vmatpush1.msra.mxu0 %v538
        %673 = vmatprep.subr.mxu0 %v543
        %674 = vmatpush1.msra.mxu0 %v542
        %675 = vmatprep.subr.mxu0 %v547
        %676 = vmatpush1.msra.mxu0 %v546
        %677 = vmatprep.subr.mxu0 %v551
        %678 = vmatpush1.msra.mxu0 %v550
        %679 = vmatprep.subr.mxu0 %v555
        %680 = vmatpush1.msra.mxu0 %v554
        %681 = vmatprep.subr.mxu0 0.0
        %682 = vmatpush1.msra.mxu0 0.0
        %683 = vmatprep.subr.mxu0 0.0
        %684 = vmatpush1.msra.mxu0 0.0
        %685 = vmatprep.subr.mxu0 0.0
        %686 = vmatpush1.msra.mxu0 0.0
        %687 = vmatprep.subr.mxu0 0.0
        %688 = vmatpush1.msra.mxu0 0.0
        %689 = vmatprep.subr.mxu0 0.0
        %690 = vmatpush1.msra.mxu0 0.0
        %691 = vmatprep.subr.mxu0 0.0
        %692 = vmatpush1.msra.mxu0 0.0
        %693 = vmatprep.subr.mxu0 0.0
        %694 = vmatpush1.msra.mxu0 0.0
        %695 = vmatprep.subr.mxu0 0.0
        %696 = vmatpush1.msra.mxu0 0.0
        %697 = vmatprep.subr.mxu0 0.0
        %698 = vmatpush1.msra.mxu0 0.0
        %699 = vmatprep.subr.mxu0 0.0
        %700 = vmatpush1.msra.mxu0 0.0
        %701 = vmatprep.subr.mxu0 0.0
        %702 = vmatpush1.msra.mxu0 0.0
        %703 = vmatprep.subr.mxu0 0.0
        %704 = vmatpush1.msra.mxu0 0.0
        %705 = vmatprep.subr.mxu0 0.0
        %706 = vmatpush1.msra.mxu0 0.0
        %707 = vmatprep.subr.mxu0 0.0
        %708 = vmatpush1.msra.mxu0 0.0
        %709 = vmatprep.subr.mxu0 0.0
        %710 = vmatpush1.msra.mxu0 0.0
        %711 = vmatprep.subr.mxu0 0.0
        %712 = vmatpush1.msra.mxu0 0.0
        %713 = vmatprep.mubr.f32.mxu0 0.0
        %714 = vmatmul.mubr.f32.gmra.mrb[0].mxu0 %v491
        %v715 = vpop.f32.mrb[0].mxu0
        %v716 = vadd.f32 %v569, %v715
        %v717 = vpop.f32.mrb[0].mxu0
        %v718 = vadd.f32 %v573, %v717
        %719 = vdwg.mxu0
        %720 = vst [vmem:[%s269] sm:$0xff] %v645
        %721 = vst [vmem:[%s269 + $0x8] sm:$0xff] %v647
        %722 = vst [vmem:[%s269 + $0x10] sm:$0xff] %v716
        %723 = vst [vmem:[%s269 + $0x18] sm:$0xff] %v718
        %s724 = sand.u32 %s141, 1
        %s725 = scalar_lea.sflag [#allocation4], %s724
        %s726 = sand.u32 %s141, 1
        %s727 = smul.addr %s726, 32
        %s728 = scalar_lea.vmem [#allocation8], %s727
        // Predicated region
        $region53: #{feed_forward.1} parent=39 // pred_check
          %p729 = pneg %p151
        $region54: #{feed_forward.1} parent=39 // pred_check_branch
          %731 = sbr.rel (%p729) target = $region56
        $region55: #{feed_forward.1} parent=39 // pred_region
          %s733 = ssub.s32 512, 512
          %734 = vsyncadd %s725, %s733
          %s735 = smul.addr %s23, 4
          %s736 = smul.addr %s735, 128
          %s737 = scalar_lea.hbm %s5, %s736
          %s739 = sshll.u32 %s728, 4
          %s740 = int_to_ptr.vmem [resolvable:$true] %s739
          %742 = dma.vmem_to_hbm [thread:$0]  %s740, 512, %s737, %s725
        $region56: #{feed_forward.1} parent=39 // pred_fallthru
          _
      $region40: #{feed_forward.1} parent=5 // pred_fallthru
        _
      %p743 = scmp.le.s32.totalorder 2, %s18
      // Predicated region
      $region57: #{feed_forward.1} parent=5 // pred_check
        %p744 = pneg %p743
      $region58: #{feed_forward.1} parent=5 // pred_check_branch
        %746 = sbr.rel (%p744) target = $region60
      $region59: #{feed_forward.1} parent=5 // pred_region
        %s747 = ssub.s32 %s18, 2
        // Predicated region
        $region61: #{feed_forward.1} parent=59 // pred_check
          %p748 = pneg %p157
        $region62: #{feed_forward.1} parent=59 // pred_check_branch
          %750 = sbr.rel (%p748) target = $region64
        $region63: #{feed_forward.1} parent=59 // pred_region
          %s751 = sand.u32 %s142, 1
          %s752 = scalar_lea.sflag [#allocation4], %s751
          %s753 = sand.u32 %s142, 1
          %s754 = smul.addr %s753, 32
          %s755 = scalar_lea.vmem [#allocation8], %s754
          %756 = dma.done %s752, 512
        $region64: #{feed_forward.1} parent=59 // pred_fallthru
          _
      $region60: #{feed_forward.1} parent=5 // pred_fallthru
        _
    $region6: #{feed_forward.1} parent=1 // loop_footer
      %s22 = sadd.s32 1, %s18
    $region7: #{feed_forward.1} parent=1 // loop_footer_branch
      %17 = sbr.rel target = $region3
    $region8: #{feed_forward.1} parent=1 // loop_exit
      _
    %757 = vsyncpa [#allocation3], 1
    %s758 = scalar_lea.sflag [#allocation3], 1
    %759 = vsyncpa %s758, 1
    %760 = vsyncpa [#allocation6], 1
    %761 = vsyncpa [#allocation4], 1
    %s762 = scalar_lea.sflag [#allocation4], 1
    %763 = vsyncpa %s762, 1

</llo_original>
